<compile_context>
chip_gen: v7x
topology: tpu7x:2x2x1
jax: 0.10.0
libtpu: 0.0.40
codegen_flags: <defaults>
</compile_context>

<pallas_src>
import functools

import jax
import jax.numpy as jnp
import numpy as np
from jax import lax
from jax.experimental import pallas as pl
from jax.experimental.pallas import tpu as pltpu


# ---------------------------------------------------------------------------
# Phase 1: accumulate per-metapath node-sums of tanh(z @ w1 + b1).
# ---------------------------------------------------------------------------
def _proj_accum_kernel(z_ref, wblk_ref, b_ref, acc_ref, *,
                       tile_nodes, n_nodes, need_mask):
    p = pl.program_id(0)
    i = pl.program_id(1)

    @pl.when(i == 0)
    def _init():
        acc_ref[...] = jnp.zeros_like(acc_ref)

    # (T, M*D) x (M*D, M*H) block-diagonal projection: dense K on the MXU,
    # f32 accumulation, then bias + tanh.
    h = jnp.dot(z_ref[...], wblk_ref[...], preferred_element_type=jnp.float32)
    h = jnp.tanh(h + b_ref[...])

    # Only emitted when a ragged / overshoot tile statically exists; applied
    # before accumulation so padding garbage never reaches the accumulator.
    if need_mask:
        base = (p * pl.num_programs(1) + i) * tile_nodes
        valid = (base + lax.broadcasted_iota(jnp.int32, (tile_nodes, 1), 0)) < n_nodes
        h = jnp.where(valid, h, 0.0)

    # Columns are metapath-major, so one sublane (axis-0) reduction accumulates
    # all M per-metapath sums at once.
    acc_ref[...] += jnp.sum(h, axis=0, keepdims=True)


# ---------------------------------------------------------------------------
# Phase 2: out[n, :] = sum_m beta[m] * z[n, m, :]  ==  z_lanes_tile @ S_beta
# ---------------------------------------------------------------------------
def _weighted_sum_kernel(z_ref, s_ref, out_ref):
    out_ref[...] = jnp.dot(z_ref[...], s_ref[...],
                           preferred_element_type=jnp.float32).astype(out_ref.dtype)


# ---------------------------------------------------------------------------
# Tile sizing (budget-aware, clamped fallback: never a silent full-array block)
# ---------------------------------------------------------------------------
def _pick_tile_nodes(n_nodes, per_node_bytes, const_bytes, budget_bytes, cap):
    avail = max(budget_bytes - const_bytes, 8 * per_node_bytes)
    t = avail // max(per_node_bytes, 1)
    t = min(int(t), n_nodes, int(cap))
    if n_nodes >= 8:
        t = max((t // 8) * 8, 8)       # (8, 128) sublane alignment
    else:
        t = n_nodes                     # tiny N: full block is always legal
    return max(t, 1)


def _vmem_capacity_bytes():
    try:
        cap = getattr(pltpu.get_tpu_info(), "vmem_capacity_bytes", None)
        if cap:
            return int(cap)
    except Exception:
        pass
    return 64 * 1024 * 1024            # conservative: v7x per-core VMEM


# ---------------------------------------------------------------------------
# Wrapper
# ---------------------------------------------------------------------------
def semantic_attention(z, w1, b1, w2, *, max_tile_nodes=8192, num_partitions=2,
                       vmem_budget_bytes=None, vmem_limit_bytes=None):
    n_nodes, n_meta, in_size = z.shape
    hidden = w1.shape[1]
    assert w1.shape == (in_size, hidden)
    assert b1.shape == (1, hidden)
    assert w2.shape == (hidden, 1)

    if vmem_limit_bytes is None:
        cap = _vmem_capacity_bytes()
        vmem_limit_bytes = min(cap * 3 // 4, 96 * 1024 * 1024)
    if vmem_budget_bytes is None:
        vmem_budget_bytes = vmem_limit_bytes * 11 // 20
    vmem_limit_bytes = int(vmem_limit_bytes)

    f32 = jnp.float32
    lanes = n_meta * in_size
    cols = n_meta * hidden
    # Free row-major re-view: lane k -> (metapath k // D, feature k % D).
    z_lanes = z.reshape(n_nodes, lanes)

    # Block-diagonal first linear and metapath-replicated bias (built once).
    w_blk = jnp.kron(jnp.eye(n_meta, dtype=f32), w1.astype(f32))   # (M*D, M*H)
    b_rep = jnp.tile(b1.astype(f32), (1, n_meta))                  # (1, M*H)

    # ---- Phase 1: per-metapath sums --------------------------------------
    per_node1 = 4 * n_meta * (2 * in_size + hidden)        # z tile (x2) + h
    const1 = 4 * (2 * lanes * cols + 4 * cols)              # w_blk x2, b/out x2
    t1 = _pick_tile_nodes(n_nodes, per_node1, const1, vmem_budget_bytes,
                          max_tile_nodes)
    tiles_total = pl.cdiv(n_nodes, t1)
    n_part = max(1, min(num_partitions, tiles_total))
    n_inner = pl.cdiv(tiles_total, n_part)
    need_mask = (n_part * n_inner * t1) != n_nodes

    if n_part * n_inner == tiles_total:
        z_map1 = lambda p, i: (p * n_inner + i, 0)
    else:
        # Overshoot tiles are clamped to the last real tile; their (logical)
        # rows are >= n_nodes so the in-kernel mask zeroes their contribution.
        z_map1 = lambda p, i: (jnp.minimum(p * n_inner + i, tiles_total - 1), 0)

    acc = pl.pallas_call(
        functools.partial(_proj_accum_kernel, tile_nodes=t1, n_nodes=n_nodes,
                          need_mask=need_mask),
        out_shape=jax.ShapeDtypeStruct((n_part, 1, cols), f32),
        grid=(n_part, n_inner),
        in_specs=[
            pl.BlockSpec((t1, lanes), z_map1),
            pl.BlockSpec((lanes, cols), lambda p, i: (0, 0)),
            pl.BlockSpec((1, cols), lambda p, i: (0, 0)),
        ],
        out_specs=pl.BlockSpec((None, 1, cols), lambda p, i: (p, 0, 0)),
        compiler_params=pltpu.CompilerParams(
            dimension_semantics=("parallel", "arbitrary"),
            vmem_limit_bytes=vmem_limit_bytes),
    )(z_lanes, w_blk, b_rep)

    # ---- Finalize in plain JAX (O(M*H), negligible) -----------------------
    h_mean = acc.sum(axis=(0, 1)).reshape(n_meta, hidden) / n_nodes   # (M, H)
    w = h_mean @ w2.astype(f32)                                       # (M, 1)
    beta = jax.nn.softmax(w, axis=0)                                  # (M, 1)
    # S_beta[m*D + d, d'] = beta[m] * (d == d'):  z_lanes @ S_beta == (beta*z).sum(1)
    s_beta = (beta[:, :, None] * jnp.eye(in_size, dtype=f32)).reshape(lanes, in_size)
    s_beta = s_beta.astype(z.dtype)

    # ---- Phase 2: weighted sum over metapaths ------------------------------
    per_node2 = 4 * (2 * lanes + 2 * in_size)
    const2 = 4 * 2 * lanes * in_size
    t2 = _pick_tile_nodes(n_nodes, per_node2, const2, vmem_budget_bytes,
                          max_tile_nodes)

    out = pl.pallas_call(
        _weighted_sum_kernel,
        out_shape=jax.ShapeDtypeStruct((n_nodes, in_size), z.dtype),
        grid=(pl.cdiv(n_nodes, t2),),
        in_specs=[
            pl.BlockSpec((t2, lanes), lambda i: (i, 0)),
            pl.BlockSpec((lanes, in_size), lambda i: (0, 0)),
        ],
        out_specs=pl.BlockSpec((t2, in_size), lambda i: (i, 0)),
        compiler_params=pltpu.CompilerParams(
            dimension_semantics=("parallel",),
            vmem_limit_bytes=vmem_limit_bytes),
    )(z_lanes, s_beta)
    return out


# ---------------------------------------------------------------------------
# Pure-JAX reference (mirrors the PyTorch module)
# ---------------------------------------------------------------------------
def semantic_attention_ref(z, w1, b1, w2):
    h = jnp.tanh(jnp.einsum('nmd,dh->nmh', z, w1) + b1)
    s = jnp.einsum('nmh,ho->nmo', h, w2)          # (N, M, 1)
    w = s.mean(axis=0)                            # (M, 1)
    beta = jax.nn.softmax(w, axis=0)              # (M, 1)
    return (beta[None, :, :] * z).sum(axis=1)     # (N, D)


if __name__ == "__main__":
    # nodes, metapaths, in_size, hidden_size (module default hidden=128)
    N, M, D, H = 64, 4, 32, 128

    key = jax.random.PRNGKey(0)
    kz, kw1, kb1, kw2 = jax.random.split(key, 4)
    z = jax.random.normal(kz, (N, M, D), dtype=jnp.float32)
    w1 = jax.random.normal(kw1, (D, H), dtype=jnp.float32) * 0.1   # Linear(D,H).weight^T
    b1 = jax.random.normal(kb1, (1, H), dtype=jnp.float32) * 0.1   # Linear(D,H).bias
    w2 = jax.random.normal(kw2, (H, 1), dtype=jnp.float32) * 0.1   # Linear(H,1,no-bias)

    ref = jax.block_until_ready(semantic_attention_ref(z, w1, b1, w2))

    # (a) single-tile fast path, (b) ragged multi-tile + 2-partition path with
    # clamped overshoot tiles, (c) exact-multiple multi-tile path.
    for tile_cap in (4096, 24, 16):
        out = jax.block_until_ready(
            semantic_attention(z, w1, b1, w2, max_tile_nodes=tile_cap))
        assert out.shape == (N, D)
        np.testing.assert_allclose(np.asarray(out), np.asarray(ref),
                                   rtol=2e-5, atol=2e-5)

    print("KERNEL_OK")
</pallas_src>

<mosaic_0001>
module attributes {stable_mosaic.version = 11 : i64} {
  func.func @_proj_accum_kernel(%arg0: i32, %arg1: i32, %arg2: memref<64x128xf32, #tpu.memory_space<vmem>>, %arg3: memref<128x512xf32, #tpu.memory_space<vmem>>, %arg4: memref<1x512xf32, #tpu.memory_space<vmem>>, %arg5: memref<1x1x512xf32, #tpu.memory_space<vmem>>) attributes {dimension_semantics = [#tpu.dimension_semantics<parallel>, #tpu.dimension_semantics<arbitrary>], iteration_bounds = array<i64: 1, 1>, scalar_prefetch = 0 : i64, scratch_operands = 0 : i64, tpu.core_type = #tpu.core_type<tc>, window_params = [{transform_indices = @transform_0, window_bounds = array<i64: 64, 128>}, {pipeline_mode = #tpu.pipeline_mode<synchronous>, transform_indices = @transform_1, window_bounds = array<i64: 128, 512>}, {pipeline_mode = #tpu.pipeline_mode<synchronous>, transform_indices = @transform_2, window_bounds = array<i64: 1, 512>}, {transform_indices = @transform_3, window_bounds = array<i64: 1, 1, 512>}]} {
    %c0_i32 = arith.constant 0 : i32
    %0 = arith.cmpi eq, %arg1, %c0_i32 : i32
    %1 = arith.extui %0 : i1 to i32
    %c0_i32_0 = arith.constant 0 : i32
    %2 = arith.cmpi ne, %1, %c0_i32_0 : i32
    scf.if %2 {
      %cst_13 = arith.constant 0.000000e+00 : f32
      %18 = vector.broadcast %cst_13 : f32 to vector<1x512xf32>
      %c0_14 = arith.constant 0 : index
      %c0_15 = arith.constant 0 : index
      %c0_16 = arith.constant 0 : index
      %19 = vector.load %arg5[%c0_14, %c0_15, %c0_16] : memref<1x1x512xf32, #tpu.memory_space<vmem>>, vector<1x1x512xf32>
      %20 = vector.shape_cast %19 : vector<1x1x512xf32> to vector<1x512xf32>
      %21 = vector.shape_cast %18 : vector<1x512xf32> to vector<1x1x512xf32>
      tpu.vector_store %arg5[%c0_14, %c0_15, %c0_16], %21 {strides = array<i32>} : memref<1x1x512xf32, #tpu.memory_space<vmem>>, vector<1x1x512xf32>,
    } else {
    }
    %c0 = arith.constant 0 : index
    %c0_1 = arith.constant 0 : index
    %3 = vector.load %arg2[%c0, %c0_1] : memref<64x128xf32, #tpu.memory_space<vmem>>, vector<64x128xf32>
    %c0_2 = arith.constant 0 : index
    %c0_3 = arith.constant 0 : index
    %4 = vector.load %arg3[%c0_2, %c0_3] : memref<128x512xf32, #tpu.memory_space<vmem>>, vector<128x512xf32>
    %cst = arith.constant dense<0.000000e+00> : vector<64x512xf32>
    %5 = tpu.matmul %3, %4, %cst {dimension_numbers = #tpu.dot_dimension_numbers<[1], [0], [0], [1], [0, 0, 1, 1], [], []>} : vector<64x128xf32>, vector<128x512xf32>, vector<64x512xf32> -> vector<64x512xf32>
    %c0_4 = arith.constant 0 : index
    %c0_5 = arith.constant 0 : index
    %6 = vector.load %arg4[%c0_4, %c0_5] : memref<1x512xf32, #tpu.memory_space<vmem>>, vector<1x512xf32>
    %7 = vector.broadcast %6 : vector<1x512xf32> to vector<64x512xf32>
    %8 = arith.addf %5, %7 : vector<64x512xf32>
    %9 = math.tanh %8 : vector<64x512xf32>
    %c0_6 = arith.constant 0 : index
    %c0_7 = arith.constant 0 : index
    %c0_8 = arith.constant 0 : index
    %10 = vector.load %arg5[%c0_6, %c0_7, %c0_8] : memref<1x1x512xf32, #tpu.memory_space<vmem>>, vector<1x1x512xf32>
    %11 = vector.shape_cast %10 : vector<1x1x512xf32> to vector<1x512xf32>
    %cst_9 = arith.constant dense<0.000000e+00> : vector<512xf32>
    %12 = vector.multi_reduction <add>, %9, %cst_9 [0] : vector<64x512xf32> to vector<512xf32>
    %13 = vector.shape_cast %12 : vector<512xf32> to vector<1x512xf32>
    %14 = arith.addf %11, %13 : vector<1x512xf32>
    %c0_10 = arith.constant 0 : index
    %c0_11 = arith.constant 0 : index
    %c0_12 = arith.constant 0 : index
    %15 = vector.load %arg5[%c0_10, %c0_11, %c0_12] : memref<1x1x512xf32, #tpu.memory_space<vmem>>, vector<1x1x512xf32>
    %16 = vector.shape_cast %15 : vector<1x1x512xf32> to vector<1x512xf32>
    %17 = vector.shape_cast %14 : vector<1x512xf32> to vector<1x1x512xf32>
    tpu.vector_store %arg5[%c0_10, %c0_11, %c0_12], %17 {strides = array<i32>} : memref<1x1x512xf32, #tpu.memory_space<vmem>>, vector<1x1x512xf32>,
    return
  }
  func.func @transform_0(%arg0: i32, %arg1: i32) -> (i32, i32) {
    %c1_i32 = arith.constant 1 : i32
    %0 = arith.muli %arg0, %c1_i32 : i32
    %1 = arith.addi %0, %arg1 : i32
    %c0_i32 = arith.constant 0 : i32
    %c0_i32_0 = arith.constant 0 : i32
    return %1, %c0_i32 : i32, i32
  }
  func.func @transform_1(%arg0: i32, %arg1: i32) -> (i32, i32) {
    %c0_i32 = arith.constant 0 : i32
    %c0_i32_0 = arith.constant 0 : i32
    %c0_i32_1 = arith.constant 0 : i32
    return %c0_i32, %c0_i32_0 : i32, i32
  }
  func.func @transform_2(%arg0: i32, %arg1: i32) -> (i32, i32) {
    %c0_i32 = arith.constant 0 : i32
    %c0_i32_0 = arith.constant 0 : i32
    %c0_i32_1 = arith.constant 0 : i32
    return %c0_i32, %c0_i32_0 : i32, i32
  }
  func.func @transform_3(%arg0: i32, %arg1: i32) -> (i32, i32, i32) {
    %c0_i32 = arith.constant 0 : i32
    %c0_i32_0 = arith.constant 0 : i32
    %c0_i32_1 = arith.constant 0 : i32
    return %arg0, %c0_i32, %c0_i32_0 : i32, i32, i32
  }
}

</mosaic_0001>

<llo_original>
// kernel: tpu_custom_call.1
$region0: #{tpu_custom_call.1}
  #allocation0 [shape = 'u32[]', space=smem, size = 0x4, offset = 0x4, fixed_abs, tag = 'smem constant byte address 0x4 - core index']
  #allocation1 [shape = 'u32[144,128]{1,0:T(1,128)}', space=vmem, size = 0x12000, scoped, tag = 'internal scratch']
  %s0 = inlined_call_operand.hbm [shape: f32[64,128], index: 0, kind: input, shape index: {}]
  %s1 = inlined_call_operand.hbm [shape: f32[128,512], index: 1, kind: input, shape index: {}]
  %s2 = inlined_call_operand.vmem [shape: f32[1,512], index: 2, kind: input, shape index: {}]
  %s3 = inlined_call_operand.hbm [shape: f32[1,1,512], index: 3, kind: output, shape index: {}]
  %s4 = sld [smem:[#allocation0]]
  $region34: #{tpu_custom_call.1} parent=0
    _
  %s6 = ssub.s32 1, %s4
  %s7 = scalar_select 0, %s6, %s4
  $region1: #{tpu_custom_call.1} parent=0
    #allocation2 [shape = 'u8[32768]{0}', space=vmem, size = 0x8000, scoped, tag = 'input window, operand 0, single buffered']
    #allocation3 [shape = 's32[1]{0}', space=sflag, size = 0x4, scoped, tag = 'scoped memory for tpu_custom_call.1']
    #allocation4 [shape = 's32[1]{0}', space=sflag, size = 0x4, scoped, tag = 'scoped memory for tpu_custom_call.1']
    #allocation5 [shape = 'u8[262144]{0}', space=vmem, size = 0x40000, scoped, tag = 'input window, operand 1, single buffered']
    #allocation6 [shape = 's32[1]{0}', space=sflag, size = 0x4, scoped, tag = 'scoped memory for tpu_custom_call.1']
    #allocation7 [shape = 'u8[2048]{0}', space=vmem, size = 0x800, scoped, tag = 'output window, operand 0, single buffered']
    %8 = vsyncpa [#allocation3], 0
    %9 = vsyncpa [#allocation6], 0
    %10 = vsyncpa [#allocation4], 0
    // Predicated region
    $region2: #{tpu_custom_call.1} parent=1 // pred_check
      _
    $region3: #{tpu_custom_call.1} parent=1 // pred_check_branch
      %12 = sbr.rel (0) target = $region5
    $region4: #{tpu_custom_call.1} parent=1 // pred_region
      %s13 = sadd.s32 0, 0
      %s14 = smul.u32 8, %s13
      %s16 = ssub.s32 1024, 1024
      %17 = vsyncadd [#allocation3], %s16
      %s18 = smul.addr %s14, 128
      %s19 = scalar_lea.hbm %s0, %s18
      %s20 = sshll.u32 [#allocation2], 4
      %s21 = int_to_ptr.vmem [resolvable:$true] %s20
      %26 = dma.hbm_to_vmem [thread:$0]  %s19, 1024, %s21, [#allocation3], 128, 128, 8
    $region5: #{tpu_custom_call.1} parent=1 // pred_fallthru
      _
    // Predicated region
    $region6: #{tpu_custom_call.1} parent=1 // pred_check
      _
    $region7: #{tpu_custom_call.1} parent=1 // pred_check_branch
      %28 = sbr.rel (0) target = $region9
    $region8: #{tpu_custom_call.1} parent=1 // pred_region
      %s30 = ssub.s32 8192, 8192
      %31 = vsyncadd [#allocation6], %s30
      %s32 = sshll.u32 [#allocation5], 4
      %s33 = int_to_ptr.vmem [resolvable:$true] %s32
      %38 = dma.hbm_to_vmem [thread:$0]  %s1, 8192, %s33, [#allocation6], 512, 512, 32
    $region9: #{tpu_custom_call.1} parent=1 // pred_fallthru
      _
    // Predicated region
    $region10: #{tpu_custom_call.1} parent=1 // pred_check
      _
    $region11: #{tpu_custom_call.1} parent=1 // pred_check_branch
      %40 = sbr.rel (0) target = $region13
    $region12: #{tpu_custom_call.1} parent=1 // pred_region
      _
    $region13: #{tpu_custom_call.1} parent=1 // pred_fallthru
      _
    // Predicated region
    $region14: #{tpu_custom_call.1} parent=1 // pred_check
      _
    $region15: #{tpu_custom_call.1} parent=1 // pred_check_branch
      %42 = sbr.rel (0) target = $region17
    $region16: #{tpu_custom_call.1} parent=1 // pred_region
      %43 = dma.done [#allocation3], 1024
    $region17: #{tpu_custom_call.1} parent=1 // pred_fallthru
      _
    // Predicated region
    $region18: #{tpu_custom_call.1} parent=1 // pred_check
      _
    $region19: #{tpu_custom_call.1} parent=1 // pred_check_branch
      %45 = sbr.rel (0) target = $region21
    $region20: #{tpu_custom_call.1} parent=1 // pred_region
      %46 = dma.done [#allocation6], 8192
    $region21: #{tpu_custom_call.1} parent=1 // pred_fallthru
      _
    %s47 = sadd.s32 0, 0
    %s48 = smul.u32 8, %s47
    %p49 = scmp.eq.s32.totalorder 0, 0
    // Predicated region
    $region22: #{tpu_custom_call.1} parent=1 // pred_check
      %p50 = pneg %p49
    $region23: #{tpu_custom_call.1} parent=1 // pred_check_branch
      %52 = sbr.rel (%p50) target = $region25
    $region24: #{tpu_custom_call.1} parent=1 // pred_region
      %v53 = vlaneseq
      %vm54 = vcmp.ge.s32.totalorder %v53, 0
      %vm55 = vcmp.lt.s32.totalorder %v53, 512
      %vm56 = vmand %vm54, %vm55
      %57 = vst.msk [vmem:[#allocation7] sm:$0xf] %vm56, 0.0
    $region25: #{tpu_custom_call.1} parent=1 // pred_fallthru
      _
    %v58 = vld [vmem:[#allocation2] sm:$0xff]
    %v59 = vld [vmem:[#allocation2 + $0x8] sm:$0xff]
    %v60 = vld [vmem:[#allocation2 + $0x10] sm:$0xff]
    %v61 = vld [vmem:[#allocation2 + $0x18] sm:$0xff]
    %v62 = vld [vmem:[#allocation2 + $0x20] sm:$0xff]
    %v63 = vld [vmem:[#allocation2 + $0x28] sm:$0xff]
    %v64 = vld [vmem:[#allocation2 + $0x30] sm:$0xff]
    %v65 = vld [vmem:[#allocation2 + $0x38] sm:$0xff]
    %v66 = vld [vmem:[#allocation5] sm:$0xff]
    %v67 = vld [vmem:[#allocation5 + $0x8] sm:$0xff]
    %v68 = vld [vmem:[#allocation5 + $0x10] sm:$0xff]
    %v69 = vld [vmem:[#allocation5 + $0x18] sm:$0xff]
    %v70 = vld [vmem:[#allocation5 + $0x20] sm:$0xff]
    %v71 = vld [vmem:[#allocation5 + $0x28] sm:$0xff]
    %v72 = vld [vmem:[#allocation5 + $0x30] sm:$0xff]
    %v73 = vld [vmem:[#allocation5 + $0x38] sm:$0xff]
    %v74 = vld [vmem:[#allocation5 + $0x40] sm:$0xff]
    %v75 = vld [vmem:[#allocation5 + $0x48] sm:$0xff]
    %v76 = vld [vmem:[#allocation5 + $0x50] sm:$0xff]
    %v77 = vld [vmem:[#allocation5 + $0x58] sm:$0xff]
    %v78 = vld [vmem:[#allocation5 + $0x60] sm:$0xff]
    %v79 = vld [vmem:[#allocation5 + $0x68] sm:$0xff]
    %v80 = vld [vmem:[#allocation5 + $0x70] sm:$0xff]
    %v81 = vld [vmem:[#allocation5 + $0x78] sm:$0xff]
    %v82 = vld [vmem:[#allocation5 + $0x80] sm:$0xff]
    %v83 = vld [vmem:[#allocation5 + $0x88] sm:$0xff]
    %v84 = vld [vmem:[#allocation5 + $0x90] sm:$0xff]
    %v85 = vld [vmem:[#allocation5 + $0x98] sm:$0xff]
    %v86 = vld [vmem:[#allocation5 + $0xa0] sm:$0xff]
    %v87 = vld [vmem:[#allocation5 + $0xa8] sm:$0xff]
    %v88 = vld [vmem:[#allocation5 + $0xb0] sm:$0xff]
    %v89 = vld [vmem:[#allocation5 + $0xb8] sm:$0xff]
    %v90 = vld [vmem:[#allocation5 + $0xc0] sm:$0xff]
    %v91 = vld [vmem:[#allocation5 + $0xc8] sm:$0xff]
    %v92 = vld [vmem:[#allocation5 + $0xd0] sm:$0xff]
    %v93 = vld [vmem:[#allocation5 + $0xd8] sm:$0xff]
    %v94 = vld [vmem:[#allocation5 + $0xe0] sm:$0xff]
    %v95 = vld [vmem:[#allocation5 + $0xe8] sm:$0xff]
    %v96 = vld [vmem:[#allocation5 + $0xf0] sm:$0xff]
    %v97 = vld [vmem:[#allocation5 + $0xf8] sm:$0xff]
    %v98 = vld [vmem:[#allocation5 + $0x100] sm:$0xff]
    %v99 = vld [vmem:[#allocation5 + $0x108] sm:$0xff]
    %v100 = vld [vmem:[#allocation5 + $0x110] sm:$0xff]
    %v101 = vld [vmem:[#allocation5 + $0x118] sm:$0xff]
    %v102 = vld [vmem:[#allocation5 + $0x120] sm:$0xff]
    %v103 = vld [vmem:[#allocation5 + $0x128] sm:$0xff]
    %v104 = vld [vmem:[#allocation5 + $0x130] sm:$0xff]
    %v105 = vld [vmem:[#allocation5 + $0x138] sm:$0xff]
    %v106 = vld [vmem:[#allocation5 + $0x140] sm:$0xff]
    %v107 = vld [vmem:[#allocation5 + $0x148] sm:$0xff]
    %v108 = vld [vmem:[#allocation5 + $0x150] sm:$0xff]
    %v109 = vld [vmem:[#allocation5 + $0x158] sm:$0xff]
    %v110 = vld [vmem:[#allocation5 + $0x160] sm:$0xff]
    %v111 = vld [vmem:[#allocation5 + $0x168] sm:$0xff]
    %v112 = vld [vmem:[#allocation5 + $0x170] sm:$0xff]
    %v113 = vld [vmem:[#allocation5 + $0x178] sm:$0xff]
    %v114 = vld [vmem:[#allocation5 + $0x180] sm:$0xff]
    %v115 = vld [vmem:[#allocation5 + $0x188] sm:$0xff]
    %v116 = vld [vmem:[#allocation5 + $0x190] sm:$0xff]
    %v117 = vld [vmem:[#allocation5 + $0x198] sm:$0xff]
    %v118 = vld [vmem:[#allocation5 + $0x1a0] sm:$0xff]
    %v119 = vld [vmem:[#allocation5 + $0x1a8] sm:$0xff]
    %v120 = vld [vmem:[#allocation5 + $0x1b0] sm:$0xff]
    %v121 = vld [vmem:[#allocation5 + $0x1b8] sm:$0xff]
    %v122 = vld [vmem:[#allocation5 + $0x1c0] sm:$0xff]
    %v123 = vld [vmem:[#allocation5 + $0x1c8] sm:$0xff]
    %v124 = vld [vmem:[#allocation5 + $0x1d0] sm:$0xff]
    %v125 = vld [vmem:[#allocation5 + $0x1d8] sm:$0xff]
    %v126 = vld [vmem:[#allocation5 + $0x1e0] sm:$0xff]
    %v127 = vld [vmem:[#allocation5 + $0x1e8] sm:$0xff]
    %v128 = vld [vmem:[#allocation5 + $0x1f0] sm:$0xff]
    %v129 = vld [vmem:[#allocation5 + $0x1f8] sm:$0xff]
    %v130 = vld [vmem:[%s2] sm:$0xf]
    %v132 = vlaneseq
    %v133 = vshrl.u32 %v132, 7
    %v134 = vsub.s32 0, %v133
    %v135 = vrot.slane %v130, %v134
    %v136 = vlaneseq
    %v137 = vshrl.u32 %v136, 7
    %v138 = vsub.s32 1, %v137
    %v139 = vrot.slane %v130, %v138
    %v140 = vlaneseq
    %v141 = vshrl.u32 %v140, 7
    %v142 = vsub.s32 2, %v141
    %v143 = vrot.slane %v130, %v142
    %v144 = vlaneseq
    %v145 = vshrl.u32 %v144, 7
    %v146 = vsub.s32 3, %v145
    %v147 = vrot.slane %v130, %v146
    %152 = vmatprep.subr.mxu0 %v67
    %153 = vmatpush1.msra.mxu0 %v66
    %154 = vmatprep.subr.mxu0 %v71
    %155 = vmatpush1.msra.mxu0 %v70
    %156 = vmatprep.subr.mxu0 %v75
    %157 = vmatpush1.msra.mxu0 %v74
    %158 = vmatprep.subr.mxu0 %v79
    %159 = vmatpush1.msra.mxu0 %v78
    %160 = vmatprep.subr.mxu0 %v83
    %161 = vmatpush1.msra.mxu0 %v82
    %162 = vmatprep.subr.mxu0 %v87
    %163 = vmatpush1.msra.mxu0 %v86
    %164 = vmatprep.subr.mxu0 %v91
    %165 = vmatpush1.msra.mxu0 %v90
    %166 = vmatprep.subr.mxu0 %v95
    %167 = vmatpush1.msra.mxu0 %v94
    %168 = vmatprep.subr.mxu0 %v99
    %169 = vmatpush1.msra.mxu0 %v98
    %170 = vmatprep.subr.mxu0 %v103
    %171 = vmatpush1.msra.mxu0 %v102
    %172 = vmatprep.subr.mxu0 %v107
    %173 = vmatpush1.msra.mxu0 %v106
    %174 = vmatprep.subr.mxu0 %v111
    %175 = vmatpush1.msra.mxu0 %v110
    %176 = vmatprep.subr.mxu0 %v115
    %177 = vmatpush1.msra.mxu0 %v114
    %178 = vmatprep.subr.mxu0 %v119
    %179 = vmatpush1.msra.mxu0 %v118
    %180 = vmatprep.subr.mxu0 %v123
    %181 = vmatpush1.msra.mxu0 %v122
    %182 = vmatprep.subr.mxu0 %v127
    %183 = vmatpush1.msra.mxu0 %v126
    %184 = vmatprep.subr.mxu0 0.0
    %185 = vmatpush1.msra.mxu0 0.0
    %186 = vmatprep.subr.mxu0 0.0
    %187 = vmatpush1.msra.mxu0 0.0
    %188 = vmatprep.subr.mxu0 0.0
    %189 = vmatpush1.msra.mxu0 0.0
    %190 = vmatprep.subr.mxu0 0.0
    %191 = vmatpush1.msra.mxu0 0.0
    %192 = vmatprep.subr.mxu0 0.0
    %193 = vmatpush1.msra.mxu0 0.0
    %194 = vmatprep.subr.mxu0 0.0
    %195 = vmatpush1.msra.mxu0 0.0
    %196 = vmatprep.subr.mxu0 0.0
    %197 = vmatpush1.msra.mxu0 0.0
    %198 = vmatprep.subr.mxu0 0.0
    %199 = vmatpush1.msra.mxu0 0.0
    %200 = vmatprep.subr.mxu0 0.0
    %201 = vmatpush1.msra.mxu0 0.0
    %202 = vmatprep.subr.mxu0 0.0
    %203 = vmatpush1.msra.mxu0 0.0
    %204 = vmatprep.subr.mxu0 0.0
    %205 = vmatpush1.msra.mxu0 0.0
    %206 = vmatprep.subr.mxu0 0.0
    %207 = vmatpush1.msra.mxu0 0.0
    %208 = vmatprep.subr.mxu0 0.0
    %209 = vmatpush1.msra.mxu0 0.0
    %210 = vmatprep.subr.mxu0 0.0
    %211 = vmatpush1.msra.mxu0 0.0
    %212 = vmatprep.subr.mxu0 0.0
    %213 = vmatpush1.msra.mxu0 0.0
    %214 = vmatprep.subr.mxu0 0.0
    %215 = vmatpush1.msra.mxu0 0.0
    %216 = vmatprep.mubr.f32.mxu0 0.0
    %217 = vmatmul.mubr.f32.gmra.mrb[0].mxu0 %v58
    %v218 = vpop.f32.mrb[0].mxu0
    %v219 = vadd.f32 %v135, %v218
    %v220 = vpop.f32.mrb[0].mxu0
    %v221 = vadd.f32 %v139, %v220
    %222 = vmatprep.mubr.f32.mxu0 0.0
    %223 = vmatmul.mubr.f32.gmra.mrb[0].mxu0 %v59
    %v224 = vpop.f32.mrb[0].mxu0
    %v225 = vadd.f32 %v135, %v224
    %v226 = vpop.f32.mrb[0].mxu0
    %v227 = vadd.f32 %v139, %v226
    %228 = vmatprep.mubr.f32.mxu0 0.0
    %229 = vmatmul.mubr.f32.gmra.mrb[0].mxu0 %v60
    %v230 = vpop.f32.mrb[0].mxu0
    %v231 = vadd.f32 %v135, %v230
    %v232 = vpop.f32.mrb[0].mxu0
    %v233 = vadd.f32 %v139, %v232
    %234 = vmatprep.mubr.f32.mxu0 0.0
    %235 = vmatmul.mubr.f32.gmra.mrb[0].mxu0 %v61
    %v236 = vpop.f32.mrb[0].mxu0
    %v237 = vadd.f32 %v135, %v236
    %v238 = vpop.f32.mrb[0].mxu0
    %v239 = vadd.f32 %v139, %v238
    %240 = vmatprep.mubr.f32.mxu0 0.0
    %241 = vmatmul.mubr.f32.gmra.mrb[0].mxu0 %v62
    %v242 = vpop.f32.mrb[0].mxu0
    %v243 = vadd.f32 %v135, %v242
    %v244 = vpop.f32.mrb[0].mxu0
    %v245 = vadd.f32 %v139, %v244
    %246 = vmatprep.mubr.f32.mxu0 0.0
    %247 = vmatmul.mubr.f32.gmra.mrb[0].mxu0 %v63
    %v248 = vpop.f32.mrb[0].mxu0
    %v249 = vadd.f32 %v135, %v248
    %v250 = vpop.f32.mrb[0].mxu0
    %v251 = vadd.f32 %v139, %v250
    %252 = vmatprep.mubr.f32.mxu0 0.0
    %253 = vmatmul.mubr.f32.gmra.mrb[0].mxu0 %v64
    %v254 = vpop.f32.mrb[0].mxu0
    %v255 = vadd.f32 %v135, %v254
    %v256 = vpop.f32.mrb[0].mxu0
    %v257 = vadd.f32 %v139, %v256
    %258 = vmatprep.mubr.f32.mxu0 0.0
    %259 = vmatmul.mubr.f32.gmra.mrb[0].mxu0 %v65
    %v260 = vpop.f32.mrb[0].mxu0
    %v261 = vadd.f32 %v135, %v260
    %v262 = vpop.f32.mrb[0].mxu0
    %v263 = vadd.f32 %v139, %v262
    %264 = vdwg.mxu0
    %265 = vmatprep.subr.mxu0 %v69
    %266 = vmatpush1.msra.mxu0 %v68
    %267 = vmatprep.subr.mxu0 %v73
    %268 = vmatpush1.msra.mxu0 %v72
    %269 = vmatprep.subr.mxu0 %v77
    %270 = vmatpush1.msra.mxu0 %v76
    %271 = vmatprep.subr.mxu0 %v81
    %272 = vmatpush1.msra.mxu0 %v80
    %273 = vmatprep.subr.mxu0 %v85
    %274 = vmatpush1.msra.mxu0 %v84
    %275 = vmatprep.subr.mxu0 %v89
    %276 = vmatpush1.msra.mxu0 %v88
    %277 = vmatprep.subr.mxu0 %v93
    %278 = vmatpush1.msra.mxu0 %v92
    %279 = vmatprep.subr.mxu0 %v97
    %280 = vmatpush1.msra.mxu0 %v96
    %281 = vmatprep.subr.mxu0 %v101
    %282 = vmatpush1.msra.mxu0 %v100
    %283 = vmatprep.subr.mxu0 %v105
    %284 = vmatpush1.msra.mxu0 %v104
    %285 = vmatprep.subr.mxu0 %v109
    %286 = vmatpush1.msra.mxu0 %v108
    %287 = vmatprep.subr.mxu0 %v113
    %288 = vmatpush1.msra.mxu0 %v112
    %289 = vmatprep.subr.mxu0 %v117
    %290 = vmatpush1.msra.mxu0 %v116
    %291 = vmatprep.subr.mxu0 %v121
    %292 = vmatpush1.msra.mxu0 %v120
    %293 = vmatprep.subr.mxu0 %v125
    %294 = vmatpush1.msra.mxu0 %v124
    %295 = vmatprep.subr.mxu0 %v129
    %296 = vmatpush1.msra.mxu0 %v128
    %297 = vmatprep.subr.mxu0 0.0
    %298 = vmatpush1.msra.mxu0 0.0
    %299 = vmatprep.subr.mxu0 0.0
    %300 = vmatpush1.msra.mxu0 0.0
    %301 = vmatprep.subr.mxu0 0.0
    %302 = vmatpush1.msra.mxu0 0.0
    %303 = vmatprep.subr.mxu0 0.0
    %304 = vmatpush1.msra.mxu0 0.0
    %305 = vmatprep.subr.mxu0 0.0
    %306 = vmatpush1.msra.mxu0 0.0
    %307 = vmatprep.subr.mxu0 0.0
    %308 = vmatpush1.msra.mxu0 0.0
    %309 = vmatprep.subr.mxu0 0.0
    %310 = vmatpush1.msra.mxu0 0.0
    %311 = vmatprep.subr.mxu0 0.0
    %312 = vmatpush1.msra.mxu0 0.0
    %313 = vmatprep.subr.mxu0 0.0
    %314 = vmatpush1.msra.mxu0 0.0
    %315 = vmatprep.subr.mxu0 0.0
    %316 = vmatpush1.msra.mxu0 0.0
    %317 = vmatprep.subr.mxu0 0.0
    %318 = vmatpush1.msra.mxu0 0.0
    %319 = vmatprep.subr.mxu0 0.0
    %320 = vmatpush1.msra.mxu0 0.0
    %321 = vmatprep.subr.mxu0 0.0
    %322 = vmatpush1.msra.mxu0 0.0
    %323 = vmatprep.subr.mxu0 0.0
    %324 = vmatpush1.msra.mxu0 0.0
    %325 = vmatprep.subr.mxu0 0.0
    %326 = vmatpush1.msra.mxu0 0.0
    %327 = vmatprep.subr.mxu0 0.0
    %328 = vmatpush1.msra.mxu0 0.0
    %329 = vmatprep.mubr.f32.mxu0 0.0
    %330 = vmatmul.mubr.f32.gmra.mrb[0].mxu0 %v58
    %v331 = vpop.f32.mrb[0].mxu0
    %v332 = vadd.f32 %v143, %v331
    %v333 = vpop.f32.mrb[0].mxu0
    %v334 = vadd.f32 %v147, %v333
    %335 = vmatprep.mubr.f32.mxu0 0.0
    %336 = vmatmul.mubr.f32.gmra.mrb[0].mxu0 %v59
    %v337 = vpop.f32.mrb[0].mxu0
    %v338 = vadd.f32 %v143, %v337
    %v339 = vpop.f32.mrb[0].mxu0
    %v340 = vadd.f32 %v147, %v339
    %341 = vmatprep.mubr.f32.mxu0 0.0
    %342 = vmatmul.mubr.f32.gmra.mrb[0].mxu0 %v60
    %v343 = vpop.f32.mrb[0].mxu0
    %v344 = vadd.f32 %v143, %v343
    %v345 = vpop.f32.mrb[0].mxu0
    %v346 = vadd.f32 %v147, %v345
    %347 = vmatprep.mubr.f32.mxu0 0.0
    %348 = vmatmul.mubr.f32.gmra.mrb[0].mxu0 %v61
    %v349 = vpop.f32.mrb[0].mxu0
    %v350 = vadd.f32 %v143, %v349
    %v351 = vpop.f32.mrb[0].mxu0
    %v352 = vadd.f32 %v147, %v351
    %353 = vmatprep.mubr.f32.mxu0 0.0
    %354 = vmatmul.mubr.f32.gmra.mrb[0].mxu0 %v62
    %v355 = vpop.f32.mrb[0].mxu0
    %v356 = vadd.f32 %v143, %v355
    %v357 = vpop.f32.mrb[0].mxu0
    %v358 = vadd.f32 %v147, %v357
    %359 = vmatprep.mubr.f32.mxu0 0.0
    %360 = vmatmul.mubr.f32.gmra.mrb[0].mxu0 %v63
    %v361 = vpop.f32.mrb[0].mxu0
    %v362 = vadd.f32 %v143, %v361
    %v363 = vpop.f32.mrb[0].mxu0
    %v364 = vadd.f32 %v147, %v363
    %365 = vmatprep.mubr.f32.mxu0 0.0
    %366 = vmatmul.mubr.f32.gmra.mrb[0].mxu0 %v64
    %v367 = vpop.f32.mrb[0].mxu0
    %v368 = vadd.f32 %v143, %v367
    %v369 = vpop.f32.mrb[0].mxu0
    %v370 = vadd.f32 %v147, %v369
    %371 = vmatprep.mubr.f32.mxu0 0.0
    %372 = vmatmul.mubr.f32.gmra.mrb[0].mxu0 %v65
    %v373 = vpop.f32.mrb[0].mxu0
    %v374 = vadd.f32 %v143, %v373
    %v375 = vpop.f32.mrb[0].mxu0
    %v376 = vadd.f32 %v147, %v375
    %377 = vdwg.mxu0
    %v378 = vtanh.pop %v219
    %v379 = vtanh.pop %v221
    %v380 = vtanh.pop %v332
    %v381 = vtanh.pop %v334
    %v382 = vtanh.pop %v225
    %v383 = vtanh.pop %v227
    %v384 = vtanh.pop %v338
    %v385 = vtanh.pop %v340
    %v386 = vtanh.pop %v231
    %v387 = vtanh.pop %v233
    %v388 = vtanh.pop %v344
    %v389 = vtanh.pop %v346
    %v390 = vtanh.pop %v237
    %v391 = vtanh.pop %v239
    %v392 = vtanh.pop %v350
    %v393 = vtanh.pop %v352
    %v394 = vtanh.pop %v243
    %v395 = vtanh.pop %v245
    %v396 = vtanh.pop %v356
    %v397 = vtanh.pop %v358
    %v398 = vtanh.pop %v249
    %v399 = vtanh.pop %v251
    %v400 = vtanh.pop %v362
    %v401 = vtanh.pop %v364
    %v402 = vtanh.pop %v255
    %v403 = vtanh.pop %v257
    %v404 = vtanh.pop %v368
    %v405 = vtanh.pop %v370
    %v406 = vtanh.pop %v261
    %v407 = vtanh.pop %v263
    %v408 = vtanh.pop %v374
    %v409 = vtanh.pop %v376
    %v410 = vld [vmem:[#allocation7] sm:$0xf]
    %v411 = vadd.f32 %v378, %v382
    %v412 = vadd.f32 %v411, %v386
    %v413 = vadd.f32 %v412, %v390
    %v414 = vadd.f32 %v413, %v394
    %v415 = vadd.f32 %v414, %v398
    %v416 = vadd.f32 %v415, %v402
    %v417 = vadd.f32 %v416, %v406
    %v418 = vrot.slane %v417, 4
    %v419 = vadd.f32 %v417, %v418
    %v420 = vrot.slane %v419, 2
    %v421 = vadd.f32 %v419, %v420
    %v422 = vrot.slane %v421, 1
    %v423 = vadd.f32 %v421, %v422
    %v424 = vadd.f32 %v379, %v383
    %v425 = vadd.f32 %v424, %v387
    %v426 = vadd.f32 %v425, %v391
    %v427 = vadd.f32 %v426, %v395
    %v428 = vadd.f32 %v427, %v399
    %v429 = vadd.f32 %v428, %v403
    %v430 = vadd.f32 %v429, %v407
    %v431 = vrot.slane %v430, 4
    %v432 = vadd.f32 %v430, %v431
    %v433 = vrot.slane %v432, 2
    %v434 = vadd.f32 %v432, %v433
    %v435 = vrot.slane %v434, 1
    %v436 = vadd.f32 %v434, %v435
    %v437 = vadd.f32 %v380, %v384
    %v438 = vadd.f32 %v437, %v388
    %v439 = vadd.f32 %v438, %v392
    %v440 = vadd.f32 %v439, %v396
    %v441 = vadd.f32 %v440, %v400
    %v442 = vadd.f32 %v441, %v404
    %v443 = vadd.f32 %v442, %v408
    %v444 = vrot.slane %v443, 4
    %v445 = vadd.f32 %v443, %v444
    %v446 = vrot.slane %v445, 2
    %v447 = vadd.f32 %v445, %v446
    %v448 = vrot.slane %v447, 1
    %v449 = vadd.f32 %v447, %v448
    %v450 = vadd.f32 %v381, %v385
    %v451 = vadd.f32 %v450, %v389
    %v452 = vadd.f32 %v451, %v393
    %v453 = vadd.f32 %v452, %v397
    %v454 = vadd.f32 %v453, %v401
    %v455 = vadd.f32 %v454, %v405
    %v456 = vadd.f32 %v455, %v409
    %v457 = vrot.slane %v456, 4
    %v458 = vadd.f32 %v456, %v457
    %v459 = vrot.slane %v458, 2
    %v460 = vadd.f32 %v458, %v459
    %v461 = vrot.slane %v460, 1
    %v462 = vadd.f32 %v460, %v461
    %v467 = vcombine.low %v423, %v436
    %v468 = vcombine.low %v449, %v462
    %v470 = vunpack.c.l.s4 1966171168
    %v471 = vunpack.c.0.s8 %v470
    %v472 = vlaneseq
    %v473 = vshrl.u32 %v472, 7
    %v474 = vsub.s32 %v471, %v473
    %v475 = vrot.slane %v467, %v474
    %v477 = vunpack.c.l.s4 1966171168
    %v478 = vunpack.c.0.s8 %v477
    %v479 = vlaneseq
    %v480 = vshrl.u32 %v479, 7
    %v481 = vsub.s32 %v478, %v480
    %v482 = vrot.slane %v468, %v481
    %v483 = vcombine.low %v475, %v482
    %v485 = vunpack.c.l.s4 1966171168
    %v486 = vunpack.c.0.s8 %v485
    %v487 = vlaneseq
    %v488 = vshrl.u32 %v487, 7
    %v489 = vsub.s32 %v486, %v488
    %v490 = vrot.slane %v483, %v489
    %v492 = vadd.f32 %v410, %v490
    %v493 = vlaneseq
    %vm494 = vcmp.ge.s32.totalorder %v493, 0
    %vm495 = vcmp.lt.s32.totalorder %v493, 512
    %vm496 = vmand %vm494, %vm495
    %497 = vst.msk [vmem:[#allocation7] sm:$0xf] %vm496, %v492
    // Predicated region
    $region26: #{tpu_custom_call.1} parent=1 // pred_check
      _
    $region27: #{tpu_custom_call.1} parent=1 // pred_check_branch
      %499 = sbr.rel (0) target = $region29
    $region28: #{tpu_custom_call.1} parent=1 // pred_region
      %s501 = ssub.s32 64, 64
      %502 = vsyncadd [#allocation4], %s501
      %s504 = sshll.u32 [#allocation7], 4
      %s505 = int_to_ptr.vmem [resolvable:$true] %s504
      %507 = dma.vmem_to_hbm [thread:$0]  %s505, 64, %s3, [#allocation4]
    $region29: #{tpu_custom_call.1} parent=1 // pred_fallthru
      _
    // Predicated region
    $region30: #{tpu_custom_call.1} parent=1 // pred_check
      _
    $region31: #{tpu_custom_call.1} parent=1 // pred_check_branch
      %509 = sbr.rel (0) target = $region33
    $region32: #{tpu_custom_call.1} parent=1 // pred_region
      %510 = dma.done [#allocation4], 64
    $region33: #{tpu_custom_call.1} parent=1 // pred_fallthru
      _
    %511 = vsyncpa [#allocation3], 1
    %512 = vsyncpa [#allocation6], 1
    %513 = vsyncpa [#allocation4], 1

</llo_original>
